<compile_context>
chip_gen: v5e
topology: v5e:2x2
jax: 0.10.0
libtpu: 0.0.40
codegen_flags: <defaults>
</compile_context>

<pallas_src>
import jax
import jax.numpy as jnp
from jax.experimental import pallas as pl
from jax.experimental.pallas import tpu as pltpu

INPUT_DIM = 12
HIDDEN_DIM = 24
COMBINED_DIM = 2 * HIDDEN_DIM   # 48
OUTPUT_DIM = 8
BN_EPS = 1e-5
LANE = 128
DEFAULT_BATCH_TILE = 8192       # ~1.5 MiB of tiles -> fits v5e/v6e/v7x defaults


def _round_up(n, m):
    return ((n + m - 1) // m) * m


def _stats_kernel(x_ref, wf_ref, bf_ref, sum_ref, ssq_ref):
    """Pass 1: per-tile sum / sum-of-squares of combined^T = relu(Wf^T x^T + bf)."""
    combined = jnp.maximum(
        jnp.dot(wf_ref[...], x_ref[...], preferred_element_type=jnp.float32)
        + bf_ref[...],
        0.0,
    )                                                        # (48, tb)
    # Batch reduction = lane reduction -> XLU (free slots next to MXU work).
    sum_ref[...] = jnp.sum(combined, axis=1, keepdims=True)[None]              # (1, 48, 1)
    ssq_ref[...] = jnp.sum(combined * combined, axis=1, keepdims=True)[None]   # (1, 48, 1)


def _apply_kernel(x_ref, wf_ref, bf_ref, w3_ref, b3_ref, o_ref):
    """Pass 2: out^T = sigmoid(W3'^T relu(Wf^T x^T + bf) + b3') for one tile."""
    combined = jnp.maximum(
        jnp.dot(wf_ref[...], x_ref[...], preferred_element_type=jnp.float32)
        + bf_ref[...],
        0.0,
    )                                                        # (48, tb)
    logits = (
        jnp.dot(w3_ref[...], combined, preferred_element_type=jnp.float32)
        + b3_ref[...]
    )                                                        # (8, tb)
    # exp rides the EUP slot; 1/(1+exp(-x)) is well-behaved at both tails.
    o_ref[...] = (1.0 / (1.0 + jnp.exp(-logits))).astype(o_ref.dtype)


def logical_configuration_layer(x, w1, b1, w2, b2, w3, b3, *,
                                batch_tile=DEFAULT_BATCH_TILE,
                                compute_dtype=jnp.bfloat16):
    """x: (B, 12) float32. Weights stored as (in, out); biases are 1-D.

    compute_dtype=jnp.bfloat16 (default) halves HBM traffic on x/Wf; pass
    jnp.float32 for tight agreement with an f32 reference.
    """
    B = x.shape[0]

    # Fuse the two parallel linears; keep everything feature-major.
    wf_t = jnp.concatenate([w1, w2], axis=1).T.astype(compute_dtype)            # (48, 12)
    bf = jnp.concatenate([b1, b2], axis=0).reshape(-1, 1).astype(jnp.float32)   # (48, 1)

    # Batch tile: a multiple of 128 lanes, as large as requested / needed.
    tb = max(LANE, _round_up(min(batch_tile, _round_up(B, LANE)), LANE))
    b_pad = _round_up(B, tb)
    nb = b_pad // tb
    n_pad = b_pad - B

    # Layout plumbing in the wrapper (transpose + cast + pad), not compute.
    x_t = x.T.astype(compute_dtype)                                             # (12, B)
    if n_pad:
        x_t = jnp.pad(x_t, ((0, 0), (0, n_pad)))

    parallel = pltpu.CompilerParams(dimension_semantics=("parallel",))
    itemsize = jnp.dtype(compute_dtype).itemsize

    x_spec = pl.BlockSpec((INPUT_DIM, tb), lambda i: (0, i))
    wf_spec = pl.BlockSpec((COMBINED_DIM, INPUT_DIM), lambda i: (0, 0))
    bf_spec = pl.BlockSpec((COMBINED_DIM, 1), lambda i: (0, 0))

    # ---- pass 1: exact BatchNorm statistics -----------------------------------
    stats_cost = pl.CostEstimate(
        flops=2 * b_pad * INPUT_DIM * COMBINED_DIM + 4 * b_pad * COMBINED_DIM,
        transcendentals=0,
        bytes_accessed=b_pad * INPUT_DIM * itemsize + nb * 2 * COMBINED_DIM * 4,
    )
    sum_part, ssq_part = pl.pallas_call(
        _stats_kernel,
        out_shape=(
            jax.ShapeDtypeStruct((nb, COMBINED_DIM, 1), jnp.float32),
            jax.ShapeDtypeStruct((nb, COMBINED_DIM, 1), jnp.float32),
        ),
        grid=(nb,),
        in_specs=[x_spec, wf_spec, bf_spec],
        out_specs=(
            pl.BlockSpec((1, COMBINED_DIM, 1), lambda i: (i, 0, 0)),
            pl.BlockSpec((1, COMBINED_DIM, 1), lambda i: (i, 0, 0)),
        ),
        compiler_params=parallel,
        cost_estimate=stats_cost,
    )(x_t, wf_t, bf)

    sum1 = jnp.sum(sum_part, axis=0)[:, 0]        # (48,)
    sum2 = jnp.sum(ssq_part, axis=0)[:, 0]        # (48,)
    if n_pad:
        # Zero-padded batch columns contribute exactly relu(bf) each; remove
        # their contribution analytically (O(48) work, replaces per-step mask).
        pad_act = jnp.maximum(bf[:, 0], 0.0)
        sum1 = sum1 - n_pad * pad_act
        sum2 = sum2 - n_pad * pad_act * pad_act

    mean = sum1 / B
    # NOTE: E[x^2] - mean^2 can cancel for huge batches / large activations;
    # fine at these scales, clamp keeps it non-negative.
    var = jnp.maximum(sum2 / B - mean * mean, 0.0)           # biased batch variance
    inv_std = jax.lax.rsqrt(var + BN_EPS)

    # Fold BatchNorm (default gamma=1, beta=0) into the final linear.
    w3_t = (w3 * inv_std[:, None]).T.astype(jnp.float32)                        # (8, 48)
    b3_t = (b3 - (mean * inv_std) @ w3).reshape(-1, 1).astype(jnp.float32)      # (8, 1)

    # ---- pass 2: streamed, lane-dense output per batch tile --------------------
    apply_cost = pl.CostEstimate(
        flops=2 * b_pad * INPUT_DIM * COMBINED_DIM
        + 2 * b_pad * COMBINED_DIM * (1 + OUTPUT_DIM)
        + 4 * b_pad * OUTPUT_DIM,
        transcendentals=b_pad * OUTPUT_DIM,
        bytes_accessed=b_pad * INPUT_DIM * itemsize + b_pad * OUTPUT_DIM * 4,
    )
    out_t = pl.pallas_call(
        _apply_kernel,
        out_shape=jax.ShapeDtypeStruct((OUTPUT_DIM, b_pad), jnp.float32),
        grid=(nb,),
        in_specs=[
            x_spec, wf_spec, bf_spec,
            pl.BlockSpec((OUTPUT_DIM, COMBINED_DIM), lambda i: (0, 0)),
            pl.BlockSpec((OUTPUT_DIM, 1), lambda i: (0, 0)),
        ],
        out_specs=pl.BlockSpec((OUTPUT_DIM, tb), lambda i: (0, i)),
        compiler_params=parallel,
        cost_estimate=apply_cost,
    )(x_t, wf_t, bf, w3_t, b3_t)

    return out_t[:, :B].T                                    # (B, 8)


def _ref_forward(x, w1, b1, w2, b2, w3, b3):
    """Pure-JAX reference matching the PyTorch forward (training-mode BN)."""
    c = jax.nn.relu(x @ w1 + b1)
    l = jax.nn.relu(x @ w2 + b2)
    comb = jnp.concatenate([c, l], axis=1)
    mean = comb.mean(axis=0, keepdims=True)
    var = ((comb - mean) ** 2).mean(axis=0, keepdims=True)
    comb = (comb - mean) / jnp.sqrt(var + BN_EPS)
    return jax.nn.sigmoid(comb @ w3 + b3)


def _init_params(key):
    """Deterministic init mirroring nn.Linear shapes (stored as (in, out))."""
    keys = jax.random.split(key, 6)

    def uniform(k, shape, fan_in):
        bound = 1.0 / jnp.sqrt(fan_in)
        return jax.random.uniform(k, shape, jnp.float32, -bound, bound)

    w1 = uniform(keys[0], (INPUT_DIM, HIDDEN_DIM), INPUT_DIM)
    b1 = uniform(keys[1], (HIDDEN_DIM,), INPUT_DIM)
    w2 = uniform(keys[2], (INPUT_DIM, HIDDEN_DIM), INPUT_DIM)
    b2 = uniform(keys[3], (HIDDEN_DIM,), INPUT_DIM)
    w3 = uniform(keys[4], (COMBINED_DIM, OUTPUT_DIM), COMBINED_DIM)
    b3 = uniform(keys[5], (OUTPUT_DIM,), COMBINED_DIM)
    return w1, b1, w2, b2, w3, b3


# TODO(synk): encode_timestamp / encode_username / process_input are host-side
# string preprocessing (datetime/ord), not part of the device forward pass.

if __name__ == "__main__":
    key = jax.random.PRNGKey(0)
    k_x1, k_x2, k_p = jax.random.split(key, 3)
    params = _init_params(k_p)

    # Case 1: exact f32 path, single tile, heavy lane padding (B=8 -> 128),
    # exercising the analytic pad-column correction in the BN statistics.
    x1 = jax.random.normal(k_x1, (8, INPUT_DIM), jnp.float32)
    out1 = jax.block_until_ready(
        logical_configuration_layer(x1, *params, compute_dtype=jnp.float32))
    ref1 = _ref_forward(x1, *params)
    assert out1.shape == (8, OUTPUT_DIM)
    assert jnp.allclose(out1, ref1, atol=1e-4, rtol=1e-4), (
        f"case1 max abs diff {jnp.max(jnp.abs(out1 - ref1))}"
    )

    # Case 2: default bf16 path, multi-tile grid (B=300, tile=128 -> 3 steps,
    # 84 padded lanes corrected analytically).
    x2 = jax.random.normal(k_x2, (300, INPUT_DIM), jnp.float32)
    out2 = jax.block_until_ready(
        logical_configuration_layer(x2, *params, batch_tile=128))
    ref2 = _ref_forward(x2, *params)
    assert out2.shape == (300, OUTPUT_DIM)
    assert jnp.allclose(out2, ref2, atol=2e-2, rtol=2e-2), (
        f"case2 max abs diff {jnp.max(jnp.abs(out2 - ref2))}"
    )

    print("KERNEL_OK")
</pallas_src>

<mosaic_0001>
module attributes {stable_mosaic.version = 11 : i64} {
  func.func @_stats_kernel(%arg0: i32, %arg1: memref<12x128xf32, #tpu.memory_space<vmem>>, %arg2: memref<48x12xf32, #tpu.memory_space<vmem>>, %arg3: memref<48x1xf32, #tpu.memory_space<vmem>>, %arg4: memref<1x48x1xf32, #tpu.memory_space<vmem>>, %arg5: memref<1x48x1xf32, #tpu.memory_space<vmem>>) attributes {dimension_semantics = [#tpu.dimension_semantics<parallel>], iteration_bounds = array<i64: 1>, scalar_prefetch = 0 : i64, scratch_operands = 0 : i64, tpu.core_type = #tpu.core_type<tc>, window_params = [{transform_indices = @transform_0, window_bounds = array<i64: 12, 128>}, {pipeline_mode = #tpu.pipeline_mode<synchronous>, transform_indices = @transform_1, window_bounds = array<i64: 48, 12>}, {pipeline_mode = #tpu.pipeline_mode<synchronous>, transform_indices = @transform_2, window_bounds = array<i64: 48, 1>}, {transform_indices = @transform_3, window_bounds = array<i64: 1, 48, 1>}, {transform_indices = @transform_4, window_bounds = array<i64: 1, 48, 1>}]} {
    %c0 = arith.constant 0 : index
    %c0_0 = arith.constant 0 : index
    %0 = vector.load %arg2[%c0, %c0_0] : memref<48x12xf32, #tpu.memory_space<vmem>>, vector<48x12xf32>
    %c0_1 = arith.constant 0 : index
    %c0_2 = arith.constant 0 : index
    %1 = vector.load %arg1[%c0_1, %c0_2] : memref<12x128xf32, #tpu.memory_space<vmem>>, vector<12x128xf32>
    %cst = arith.constant dense<0.000000e+00> : vector<48x128xf32>
    %2 = tpu.matmul %0, %1, %cst {dimension_numbers = #tpu.dot_dimension_numbers<[1], [0], [0], [1], [0, 0, 1, 1], [], []>} : vector<48x12xf32>, vector<12x128xf32>, vector<48x128xf32> -> vector<48x128xf32>
    %c0_3 = arith.constant 0 : index
    %c0_4 = arith.constant 0 : index
    %3 = vector.load %arg3[%c0_3, %c0_4] : memref<48x1xf32, #tpu.memory_space<vmem>>, vector<48x1xf32>
    %4 = vector.broadcast %3 : vector<48x1xf32> to vector<48x128xf32>
    %5 = arith.addf %2, %4 : vector<48x128xf32>
    %cst_5 = arith.constant 0.000000e+00 : f32
    %6 = vector.broadcast %cst_5 : f32 to vector<48x128xf32>
    %7 = arith.maximumf %5, %6 : vector<48x128xf32>
    %cst_6 = arith.constant dense<0.000000e+00> : vector<48xf32>
    %8 = vector.multi_reduction <add>, %7, %cst_6 [1] : vector<48x128xf32> to vector<48xf32>
    %9 = vector.shape_cast %8 : vector<48xf32> to vector<48x1xf32>
    %10 = vector.shape_cast %9 : vector<48x1xf32> to vector<1x48x1xf32>
    %c0_7 = arith.constant 0 : index
    %c0_8 = arith.constant 0 : index
    %c0_9 = arith.constant 0 : index
    %11 = vector.load %arg4[%c0_7, %c0_8, %c0_9] : memref<1x48x1xf32, #tpu.memory_space<vmem>>, vector<1x48x1xf32>
    tpu.vector_store %arg4[%c0_7, %c0_8, %c0_9], %10 {strides = array<i32>} : memref<1x48x1xf32, #tpu.memory_space<vmem>>, vector<1x48x1xf32>,
    %12 = arith.mulf %7, %7 : vector<48x128xf32>
    %cst_10 = arith.constant dense<0.000000e+00> : vector<48xf32>
    %13 = vector.multi_reduction <add>, %12, %cst_10 [1] : vector<48x128xf32> to vector<48xf32>
    %14 = vector.shape_cast %13 : vector<48xf32> to vector<48x1xf32>
    %15 = vector.shape_cast %14 : vector<48x1xf32> to vector<1x48x1xf32>
    %c0_11 = arith.constant 0 : index
    %c0_12 = arith.constant 0 : index
    %c0_13 = arith.constant 0 : index
    %16 = vector.load %arg5[%c0_11, %c0_12, %c0_13] : memref<1x48x1xf32, #tpu.memory_space<vmem>>, vector<1x48x1xf32>
    tpu.vector_store %arg5[%c0_11, %c0_12, %c0_13], %15 {strides = array<i32>} : memref<1x48x1xf32, #tpu.memory_space<vmem>>, vector<1x48x1xf32>,
    return
  }
  func.func @transform_0(%arg0: i32) -> (i32, i32) {
    %c0_i32 = arith.constant 0 : i32
    %c0_i32_0 = arith.constant 0 : i32
    return %c0_i32, %arg0 : i32, i32
  }
  func.func @transform_1(%arg0: i32) -> (i32, i32) {
    %c0_i32 = arith.constant 0 : i32
    %c0_i32_0 = arith.constant 0 : i32
    %c0_i32_1 = arith.constant 0 : i32
    return %c0_i32, %c0_i32_0 : i32, i32
  }
  func.func @transform_2(%arg0: i32) -> (i32, i32) {
    %c0_i32 = arith.constant 0 : i32
    %c0_i32_0 = arith.constant 0 : i32
    %c0_i32_1 = arith.constant 0 : i32
    return %c0_i32, %c0_i32_0 : i32, i32
  }
  func.func @transform_3(%arg0: i32) -> (i32, i32, i32) {
    %c0_i32 = arith.constant 0 : i32
    %c0_i32_0 = arith.constant 0 : i32
    %c0_i32_1 = arith.constant 0 : i32
    return %arg0, %c0_i32, %c0_i32_0 : i32, i32, i32
  }
  func.func @transform_4(%arg0: i32) -> (i32, i32, i32) {
    %c0_i32 = arith.constant 0 : i32
    %c0_i32_0 = arith.constant 0 : i32
    %c0_i32_1 = arith.constant 0 : i32
    return %arg0, %c0_i32, %c0_i32_0 : i32, i32, i32
  }
}

</mosaic_0001>

<llo_original>
// kernel: tpu_custom_call.1
$region0: #{tpu_custom_call.1}
  #allocation0 [shape = 'u32[]', space=smem, size = 0x4, offset = 0x4, fixed_abs, tag = 'smem constant byte address 0x4 - core index']
  #allocation1 [shape = 'u32[72,128]{1,0:T(1,128)}', space=vmem, size = 0x9000, scoped, tag = 'internal scratch']
  %s0 = inlined_call_operand.vmem [shape: f32[12,128], index: 0, kind: input, shape index: {}]
  %s1 = inlined_call_operand.vmem [shape: f32[48,12], index: 1, kind: input, shape index: {}]
  %s2 = inlined_call_operand.vmem [shape: f32[48,1], index: 2, kind: input, shape index: {}]
  %s3 = inlined_call_operand.vmem [shape: f32[1,48,1], index: 3, kind: output, shape index: {0}]
  %s4 = inlined_call_operand.vmem [shape: f32[1,48,1], index: 4, kind: output, shape index: {1}]
  %5 = xla_tuple %s3, %s4
  %s6 = sld [smem:[#allocation0]]
  $region30: #{tpu_custom_call.1} parent=0
    _
  %s8 = ssub.s32 1, %s6
  %s9 = scalar_select 0, %s8, %s6
  // Predicated region
  $region2: #{tpu_custom_call.1} parent=0 // pred_check
    _
  $region3: #{tpu_custom_call.1} parent=0 // pred_check_branch
    %11 = sbr.rel (0) target = $region5
  $region4: #{tpu_custom_call.1} parent=0 // pred_region
    _
  $region5: #{tpu_custom_call.1} parent=0 // pred_fallthru
    _
  // Predicated region
  $region6: #{tpu_custom_call.1} parent=0 // pred_check
    _
  $region7: #{tpu_custom_call.1} parent=0 // pred_check_branch
    %13 = sbr.rel (0) target = $region9
  $region8: #{tpu_custom_call.1} parent=0 // pred_region
    _
  $region9: #{tpu_custom_call.1} parent=0 // pred_fallthru
    _
  // Predicated region
  $region10: #{tpu_custom_call.1} parent=0 // pred_check
    _
  $region11: #{tpu_custom_call.1} parent=0 // pred_check_branch
    %15 = sbr.rel (0) target = $region13
  $region12: #{tpu_custom_call.1} parent=0 // pred_region
    _
  $region13: #{tpu_custom_call.1} parent=0 // pred_fallthru
    _
  %v16 = vld [vmem:[%s1] sm:$0xff]
  %v17 = vld [vmem:[%s1 + $0x8] sm:$0xff]
  %v18 = vld [vmem:[%s1 + $0x10] sm:$0xff]
  %v19 = vld [vmem:[%s1 + $0x18] sm:$0xff]
  %v20 = vld [vmem:[%s1 + $0x20] sm:$0xff]
  %v21 = vld [vmem:[%s1 + $0x28] sm:$0xff]
  %v22 = vld [vmem:[%s0] sm:$0xff]
  %v23 = vld [vmem:[%s0 + $0x8] sm:$0xf]
  %v24 = vld [vmem:[%s2] sm:$0xff]
  %v25 = vld [vmem:[%s2 + $0x8] sm:$0xff]
  %v26 = vld [vmem:[%s2 + $0x10] sm:$0xff]
  %v27 = vld [vmem:[%s2 + $0x18] sm:$0xff]
  %v28 = vld [vmem:[%s2 + $0x20] sm:$0xff]
  %v29 = vld [vmem:[%s2 + $0x28] sm:$0xff]
  %31 = vset.pattern.permute.xlu0 0
  %32 = vperm.xlu0 %31, %v24
  %v33 = vpop.permute.xlu0 %32
  %36 = vset.pattern.permute.xlu0 0
  %37 = vperm.xlu0 %36, %v25
  %v38 = vpop.permute.xlu0 %37
  %41 = vset.pattern.permute.xlu0 0
  %42 = vperm.xlu0 %41, %v26
  %v43 = vpop.permute.xlu0 %42
  %46 = vset.pattern.permute.xlu0 0
  %47 = vperm.xlu0 %46, %v27
  %v48 = vpop.permute.xlu0 %47
  %51 = vset.pattern.permute.xlu0 0
  %52 = vperm.xlu0 %51, %v28
  %v53 = vpop.permute.xlu0 %52
  %56 = vset.pattern.permute.xlu0 0
  %57 = vperm.xlu0 %56, %v29
  %v58 = vpop.permute.xlu0 %57
  %vm60 = vcmask 97280
  %v62 = vsel %vm60, %v16, 0
  %v65 = vsel %vm60, %v17, 0
  %v68 = vsel %vm60, %v18, 0
  %v71 = vsel %vm60, %v19, 0
  %v74 = vsel %vm60, %v20, 0
  %v77 = vsel %vm60, %v21, 0
  %vm79 = vcmask 1043456
  %v81 = vsel %vm79, %v23, 0
  %83 = vmatpush.msra.mxu0 0.0
  %84 = vmatpush.msra.mxu0 0.0
  %85 = vmatpush.msra.mxu0 0.0
  %86 = vmatpush.msra.mxu0 0.0
  %87 = vmatpush.msra.mxu0 0.0
  %88 = vmatpush.msra.mxu0 0.0
  %89 = vmatpush.msra.mxu0 0.0
  %90 = vmatpush.msra.mxu0 0.0
  %91 = vmatpush.msra.mxu0 0.0
  %92 = vmatpush.msra.mxu0 0.0
  %93 = vmatpush.msra.mxu0 0.0
  %94 = vmatpush.msra.mxu0 0.0
  %95 = vmatpush.msra.mxu0 0.0
  %96 = vmatpush.msra.mxu0 0.0
  %97 = vmatpush.msra.mxu0 %v81
  %98 = vmatpush.msra.mxu0 %v22
  %99 = vmatmul.f32.gmra.mxu0 %v62
  %v100 = vpop.f32.mrf.mxu0
  %v101 = vadd.f32 %v33, %v100
  %102 = vmatmul.f32.gmra.mxu0 %v65
  %v103 = vpop.f32.mrf.mxu0
  %v104 = vadd.f32 %v38, %v103
  %105 = vmatmul.f32.gmra.mxu0 %v68
  %v106 = vpop.f32.mrf.mxu0
  %v107 = vadd.f32 %v43, %v106
  %108 = vmatmul.f32.gmra.mxu0 %v71
  %v109 = vpop.f32.mrf.mxu0
  %v110 = vadd.f32 %v48, %v109
  %111 = vmatmul.f32.gmra.mxu0 %v74
  %v112 = vpop.f32.mrf.mxu0
  %v113 = vadd.f32 %v53, %v112
  %114 = vmatmul.f32.gmra.mxu0 %v77
  %v115 = vpop.f32.mrf.mxu0
  %v116 = vadd.f32 %v58, %v115
  %117 = vdwg.mxu0
  %v118 = vmax.f32 %v101, 0.0
  %v119 = vmax.f32 %v104, 0.0
  %v120 = vmax.f32 %v107, 0.0
  %v121 = vmax.f32 %v110, 0.0
  %v122 = vmax.f32 %v113, 0.0
  %v123 = vmax.f32 %v116, 0.0
  %124 = vadd.xlane.f32.xlu0 %v118
  %v125 = vpop.xlane.xlu0 %124
  %126 = vadd.xlane.f32.xlu0 %v119
  %v127 = vpop.xlane.xlu0 %126
  %128 = vadd.xlane.f32.xlu0 %v120
  %v129 = vpop.xlane.xlu0 %128
  %130 = vadd.xlane.f32.xlu0 %v121
  %v131 = vpop.xlane.xlu0 %130
  %132 = vadd.xlane.f32.xlu0 %v122
  %v133 = vpop.xlane.xlu0 %132
  %134 = vadd.xlane.f32.xlu0 %v123
  %v135 = vpop.xlane.xlu0 %134
  %vm136 = vcmask 7168
  %137 = vst.msk [vmem:[%s3] sm:$0xff] %vm136, %v125
  %138 = vst.msk [vmem:[%s3 + $0x8] sm:$0xff] %vm136, %v127
  %139 = vst.msk [vmem:[%s3 + $0x10] sm:$0xff] %vm136, %v129
  %140 = vst.msk [vmem:[%s3 + $0x18] sm:$0xff] %vm136, %v131
  %141 = vst.msk [vmem:[%s3 + $0x20] sm:$0xff] %vm136, %v133
  %142 = vst.msk [vmem:[%s3 + $0x28] sm:$0xff] %vm136, %v135
  %v143 = vmul.f32 %v118, %v118
  %v144 = vmul.f32 %v119, %v119
  %v145 = vmul.f32 %v120, %v120
  %v146 = vmul.f32 %v121, %v121
  %v147 = vmul.f32 %v122, %v122
  %v148 = vmul.f32 %v123, %v123
  %149 = vadd.xlane.f32.xlu0 %v143
  %v150 = vpop.xlane.xlu0 %149
  %151 = vadd.xlane.f32.xlu0 %v144
  %v152 = vpop.xlane.xlu0 %151
  %153 = vadd.xlane.f32.xlu0 %v145
  %v154 = vpop.xlane.xlu0 %153
  %155 = vadd.xlane.f32.xlu0 %v146
  %v156 = vpop.xlane.xlu0 %155
  %157 = vadd.xlane.f32.xlu0 %v147
  %v158 = vpop.xlane.xlu0 %157
  %159 = vadd.xlane.f32.xlu0 %v148
  %v160 = vpop.xlane.xlu0 %159
  %161 = vst.msk [vmem:[%s4] sm:$0xff] %vm136, %v150
  %162 = vst.msk [vmem:[%s4 + $0x8] sm:$0xff] %vm136, %v152
  %163 = vst.msk [vmem:[%s4 + $0x10] sm:$0xff] %vm136, %v154
  %164 = vst.msk [vmem:[%s4 + $0x18] sm:$0xff] %vm136, %v156
  %165 = vst.msk [vmem:[%s4 + $0x20] sm:$0xff] %vm136, %v158
  %166 = vst.msk [vmem:[%s4 + $0x28] sm:$0xff] %vm136, %v160
  // Predicated region
  $region14: #{tpu_custom_call.1} parent=0 // pred_check
    _
  $region15: #{tpu_custom_call.1} parent=0 // pred_check_branch
    %168 = sbr.rel (0) target = $region17
  $region16: #{tpu_custom_call.1} parent=0 // pred_region
    _
  $region17: #{tpu_custom_call.1} parent=0 // pred_fallthru
    _
  // Predicated region
  $region18: #{tpu_custom_call.1} parent=0 // pred_check
    _
  $region19: #{tpu_custom_call.1} parent=0 // pred_check_branch
    %170 = sbr.rel (0) target = $region21
  $region20: #{tpu_custom_call.1} parent=0 // pred_region
    _
  $region21: #{tpu_custom_call.1} parent=0 // pred_fallthru
    _
  // Predicated region
  $region22: #{tpu_custom_call.1} parent=0 // pred_check
    _
  $region23: #{tpu_custom_call.1} parent=0 // pred_check_branch
    %172 = sbr.rel (0) target = $region25
  $region24: #{tpu_custom_call.1} parent=0 // pred_region
    _
  $region25: #{tpu_custom_call.1} parent=0 // pred_fallthru
    _
  // Predicated region
  $region26: #{tpu_custom_call.1} parent=0 // pred_check
    _
  $region27: #{tpu_custom_call.1} parent=0 // pred_check_branch
    %174 = sbr.rel (0) target = $region29
  $region28: #{tpu_custom_call.1} parent=0 // pred_region
    _
  $region29: #{tpu_custom_call.1} parent=0 // pred_fallthru
    _

</llo_original>
